<compile_context>
chip_gen: v7x
topology: tpu7x:2x2x1
jax: 0.10.0
libtpu: 0.0.40
codegen_flags: <defaults>
</compile_context>

<pallas_src>
import functools

import jax
import jax.numpy as jnp
from jax.experimental import pallas as pl
from jax.experimental.pallas import tpu as pltpu


# ---------------------------------------------------------------------------
# Pass 1: global average pool (accumulated over HW tiles) + squeeze/excite FCs.
# ---------------------------------------------------------------------------
def _pool_fc_kernel(x_ref, w1_ref, b1_ref, w2_ref, b2_ref, s_ref, acc_ref, *, inv_hw):
    j = pl.program_id(0)

    @pl.when(j == 0)
    def _():
        acc_ref[...] = jnp.zeros_like(acc_ref)

    # x_ref: (N, thw, C) -- sublane reduction over the spatial tile, accumulated in f32.
    acc_ref[...] += jnp.sum(x_ref[...].astype(jnp.float32), axis=1)

    @pl.when(j == pl.num_programs(0) - 1)
    def _():
        pooled = acc_ref[...] * inv_hw                                   # (N, C)
        h = jnp.dot(pooled, w1_ref[...],
                    preferred_element_type=jnp.float32) + b1_ref[...]    # (N, Cr)
        h = jnp.maximum(h, 0.0)                                          # ReLU
        s = jnp.dot(h, w2_ref[...],
                    preferred_element_type=jnp.float32) + b2_ref[...]    # (N, C)
        s_ref[...] = jax.nn.sigmoid(s)                                   # Sigmoid


# ---------------------------------------------------------------------------
# Pass 2: channel-wise reweight, tiled over (N, HW) -- pure broadcast-multiply.
# ---------------------------------------------------------------------------
def _reweight_kernel(x_ref, s_ref, o_ref):
    # x_ref: (thw, C); s_ref: (1, C) -> sublane broadcast along the spatial tile.
    o_ref[...] = (x_ref[...] * s_ref[...]).astype(o_ref.dtype)


def _pick_hw_tile(hw, lane_elems, itemsize, target_bytes):
    """Largest spatial tile (multiple of 8 sublanes, divisor of hw) under target_bytes."""
    max_rows = max(8, target_bytes // max(1, lane_elems * itemsize))
    if hw <= max_rows:
        return hw
    t = (max_rows // 8) * 8
    while t >= 8:
        if hw % t == 0:
            return t
        t -= 8
    return hw  # no aligned divisor found; fall back to the full slab


def _vmem_limit(needed_bytes):
    # Explicit scoped-VMEM budget: stay well under v7x's 64 MiB physical VMEM.
    return int(min(max(needed_bytes + (4 << 20), 16 << 20), 48 << 20))


def squeeze_excitation(x_nchw, w1, b1, w2, b2):
    """SE block.  x_nchw: (N,C,H,W); w1: (C//r, C); b1: (C//r,); w2: (C, C//r); b2: (C,)."""
    N, C, H, W = x_nchw.shape
    Cr = w1.shape[0]
    HW = H * W
    itemsize = x_nchw.dtype.itemsize

    # Lane-dense layout: channels last (lanes), flattened spatial on sublanes.
    x = jnp.transpose(x_nchw, (0, 2, 3, 1)).reshape(N, HW, C)
    w1t = w1.T.astype(jnp.float32)               # (C, Cr)
    w2t = w2.T.astype(jnp.float32)               # (Cr, C)
    b1r = b1.reshape(1, Cr).astype(jnp.float32)  # lane-dense bias row
    b2r = b2.reshape(1, C).astype(jnp.float32)   # lane-dense bias row

    # ---- pass 1: per-(N, C) sigmoid scales -----------------------------------
    thw_pool = _pick_hw_tile(HW, N * C, itemsize, target_bytes=4 << 20)
    n_pool_steps = HW // thw_pool
    pool_vmem = (2 * N * thw_pool * C * itemsize             # x, double-buffered
                 + 2 * (C * Cr + Cr + Cr * C + C) * 4        # weights / biases
                 + 3 * N * C * 4)                            # scales out + accumulator
    pool_cost = pl.CostEstimate(
        flops=int(N * HW * C + 4 * N * C * Cr),
        transcendentals=int(N * C),
        bytes_accessed=int(N * HW * C * itemsize + (2 * C * Cr + C + Cr) * 4 + N * C * 4),
    )
    scales = pl.pallas_call(
        functools.partial(_pool_fc_kernel, inv_hw=1.0 / HW),
        out_shape=jax.ShapeDtypeStruct((N, C), jnp.float32),
        grid_spec=pltpu.PrefetchScalarGridSpec(
            num_scalar_prefetch=0,
            grid=(n_pool_steps,),
            in_specs=[
                pl.BlockSpec((N, thw_pool, C), lambda j: (0, j, 0)),   # x spatial tile
                pl.BlockSpec((C, Cr), lambda j: (0, 0)),               # w1^T
                pl.BlockSpec((1, Cr), lambda j: (0, 0)),               # b1 row
                pl.BlockSpec((Cr, C), lambda j: (0, 0)),               # w2^T
                pl.BlockSpec((1, C), lambda j: (0, 0)),                # b2 row
            ],
            out_specs=pl.BlockSpec((N, C), lambda j: (0, 0)),          # resident output
            scratch_shapes=[pltpu.VMEM((N, C), jnp.float32)],
        ),
        compiler_params=pltpu.CompilerParams(
            dimension_semantics=("arbitrary",),
            vmem_limit_bytes=_vmem_limit(pool_vmem),
        ),
        cost_estimate=pool_cost,
    )(x, w1t, b1r, w2t, b2r)

    # ---- pass 2: broadcast-multiply, tiled over (N, HW) -----------------------
    thw_mul = _pick_hw_tile(HW, C, itemsize, target_bytes=2 << 20)
    n_mul_steps = HW // thw_mul
    mul_vmem = 4 * thw_mul * C * itemsize + 2 * C * 4  # x + out double-buffered + scales
    mul_cost = pl.CostEstimate(
        flops=int(N * HW * C),
        transcendentals=0,
        bytes_accessed=int(2 * N * HW * C * itemsize + N * C * 4),
    )
    out = pl.pallas_call(
        _reweight_kernel,
        out_shape=jax.ShapeDtypeStruct((N, HW, C), x.dtype),
        grid_spec=pltpu.PrefetchScalarGridSpec(
            num_scalar_prefetch=0,
            grid=(N, n_mul_steps),
            in_specs=[
                pl.BlockSpec((pl.Squeezed(), thw_mul, C), lambda i, j: (i, j, 0)),  # x
                pl.BlockSpec((1, C), lambda i, j: (i, 0)),                          # scales
            ],
            out_specs=pl.BlockSpec((pl.Squeezed(), thw_mul, C), lambda i, j: (i, j, 0)),
        ),
        compiler_params=pltpu.CompilerParams(
            dimension_semantics=("parallel", "parallel"),
            vmem_limit_bytes=_vmem_limit(mul_vmem),
        ),
        cost_estimate=mul_cost,
    )(x, scales)

    return jnp.transpose(out.reshape(N, H, W, C), (0, 3, 1, 2))


def reference(x, w1, b1, w2, b2):
    pooled = jnp.mean(x, axis=(2, 3), keepdims=True)                          # (N,C,1,1)
    h = jnp.einsum('oc,ncij->noij', w1, pooled) + b1[None, :, None, None]     # (N,Cr,1,1)
    h = jnp.maximum(h, 0.0)
    s = jnp.einsum('oc,ncij->noij', w2, h) + b2[None, :, None, None]          # (N,C,1,1)
    s = jax.nn.sigmoid(s)
    return x * s


if __name__ == "__main__":
    N, C, H, W = 2, 4, 16, 16
    r = 2
    Cr = C // r

    key = jax.random.PRNGKey(0)
    kx, k1, k2, k3, k4 = jax.random.split(key, 5)

    x = jax.random.normal(kx, (N, C, H, W), dtype=jnp.float32)
    # Deterministic synthetic 1x1-conv parameters (shapes from nn.Conv2d(in, out, 1)).
    w1 = jax.random.normal(k1, (Cr, C), dtype=jnp.float32) * 0.5   # Conv1x1(C -> C//r) weight
    b1 = jax.random.normal(k2, (Cr,), dtype=jnp.float32) * 0.1     # its bias
    w2 = jax.random.normal(k3, (C, Cr), dtype=jnp.float32) * 0.5   # Conv1x1(C//r -> C) weight
    b2 = jax.random.normal(k4, (C,), dtype=jnp.float32) * 0.1      # its bias

    out = squeeze_excitation(x, w1, b1, w2, b2)
    out = jax.block_until_ready(out)

    ref = reference(x, w1, b1, w2, b2)
    assert out.shape == (N, C, H, W)
    assert jnp.allclose(out, ref, atol=1e-5, rtol=1e-5), "mismatch vs pure-JAX reference"

    print("KERNEL_OK")
</pallas_src>

<mosaic_0001>
module attributes {stable_mosaic.version = 11 : i64} {
  func.func @_pool_fc_kernel(%arg0: i32, %arg1: memref<2x256x4xf32, #tpu.memory_space<vmem>>, %arg2: memref<4x2xf32, #tpu.memory_space<vmem>>, %arg3: memref<1x2xf32, #tpu.memory_space<vmem>>, %arg4: memref<2x4xf32, #tpu.memory_space<vmem>>, %arg5: memref<1x4xf32, #tpu.memory_space<vmem>>, %arg6: memref<2x4xf32, #tpu.memory_space<vmem>>, %arg7: memref<2x4xf32, #tpu.memory_space<vmem>>) attributes {dimension_semantics = [#tpu.dimension_semantics<arbitrary>], iteration_bounds = array<i64: 1>, scalar_prefetch = 0 : i64, scratch_operands = 1 : i64, tpu.core_type = #tpu.core_type<tc>, window_params = [{transform_indices = @transform_0, window_bounds = array<i64: 2, 256, 4>}, {pipeline_mode = #tpu.pipeline_mode<synchronous>, transform_indices = @transform_1, window_bounds = array<i64: 4, 2>}, {pipeline_mode = #tpu.pipeline_mode<synchronous>, transform_indices = @transform_2, window_bounds = array<i64: 1, 2>}, {pipeline_mode = #tpu.pipeline_mode<synchronous>, transform_indices = @transform_3, window_bounds = array<i64: 2, 4>}, {pipeline_mode = #tpu.pipeline_mode<synchronous>, transform_indices = @transform_4, window_bounds = array<i64: 1, 4>}, {pipeline_mode = #tpu.pipeline_mode<synchronous>, transform_indices = @transform_5, window_bounds = array<i64: 2, 4>}]} {
    %c0_i32 = arith.constant 0 : i32
    %0 = arith.cmpi eq, %arg0, %c0_i32 : i32
    %1 = arith.extui %0 : i1 to i32
    %c0_i32_0 = arith.constant 0 : i32
    %2 = arith.cmpi ne, %1, %c0_i32_0 : i32
    scf.if %2 {
      %cst_9 = arith.constant 0.000000e+00 : f32
      %11 = vector.broadcast %cst_9 : f32 to vector<2x4xf32>
      %c0_10 = arith.constant 0 : index
      %c0_11 = arith.constant 0 : index
      %12 = vector.load %arg7[%c0_10, %c0_11] : memref<2x4xf32, #tpu.memory_space<vmem>>, vector<2x4xf32>
      tpu.vector_store %arg7[%c0_10, %c0_11], %11 {strides = array<i32>} : memref<2x4xf32, #tpu.memory_space<vmem>>, vector<2x4xf32>,
    } else {
    }
    %c0 = arith.constant 0 : index
    %c0_1 = arith.constant 0 : index
    %3 = vector.load %arg7[%c0, %c0_1] : memref<2x4xf32, #tpu.memory_space<vmem>>, vector<2x4xf32>
    %c0_2 = arith.constant 0 : index
    %c0_3 = arith.constant 0 : index
    %c0_4 = arith.constant 0 : index
    %4 = vector.load %arg1[%c0_2, %c0_3, %c0_4] : memref<2x256x4xf32, #tpu.memory_space<vmem>>, vector<2x256x4xf32>
    %cst = arith.constant dense<0.000000e+00> : vector<2x4xf32>
    %5 = vector.multi_reduction <add>, %4, %cst [1] : vector<2x256x4xf32> to vector<2x4xf32>
    %6 = arith.addf %3, %5 : vector<2x4xf32>
    %c0_5 = arith.constant 0 : index
    %c0_6 = arith.constant 0 : index
    %7 = vector.load %arg7[%c0_5, %c0_6] : memref<2x4xf32, #tpu.memory_space<vmem>>, vector<2x4xf32>
    tpu.vector_store %arg7[%c0_5, %c0_6], %6 {strides = array<i32>} : memref<2x4xf32, #tpu.memory_space<vmem>>, vector<2x4xf32>,
    %c0_i32_7 = arith.constant 0 : i32
    %8 = arith.cmpi eq, %arg0, %c0_i32_7 : i32
    %9 = arith.extui %8 : i1 to i32
    %c0_i32_8 = arith.constant 0 : i32
    %10 = arith.cmpi ne, %9, %c0_i32_8 : i32
    scf.if %10 {
      %c0_9 = arith.constant 0 : index
      %c0_10 = arith.constant 0 : index
      %11 = vector.load %arg7[%c0_9, %c0_10] : memref<2x4xf32, #tpu.memory_space<vmem>>, vector<2x4xf32>
      %cst_11 = arith.constant 3.906250e-03 : f32
      %12 = vector.broadcast %cst_11 : f32 to vector<2x4xf32>
      %13 = arith.mulf %11, %12 : vector<2x4xf32>
      %c0_12 = arith.constant 0 : index
      %c0_13 = arith.constant 0 : index
      %14 = vector.load %arg2[%c0_12, %c0_13] : memref<4x2xf32, #tpu.memory_space<vmem>>, vector<4x2xf32>
      %cst_14 = arith.constant dense<0.000000e+00> : vector<2x2xf32>
      %15 = tpu.matmul %13, %14, %cst_14 {dimension_numbers = #tpu.dot_dimension_numbers<[1], [0], [0], [1], [0, 0, 1, 1], [], []>} : vector<2x4xf32>, vector<4x2xf32>, vector<2x2xf32> -> vector<2x2xf32>
      %c0_15 = arith.constant 0 : index
      %c0_16 = arith.constant 0 : index
      %16 = vector.load %arg3[%c0_15, %c0_16] : memref<1x2xf32, #tpu.memory_space<vmem>>, vector<1x2xf32>
      %17 = vector.broadcast %16 : vector<1x2xf32> to vector<2x2xf32>
      %18 = arith.addf %15, %17 : vector<2x2xf32>
      %cst_17 = arith.constant 0.000000e+00 : f32
      %19 = vector.broadcast %cst_17 : f32 to vector<2x2xf32>
      %20 = arith.maximumf %18, %19 : vector<2x2xf32>
      %c0_18 = arith.constant 0 : index
      %c0_19 = arith.constant 0 : index
      %21 = vector.load %arg4[%c0_18, %c0_19] : memref<2x4xf32, #tpu.memory_space<vmem>>, vector<2x4xf32>
      %cst_20 = arith.constant dense<0.000000e+00> : vector<2x4xf32>
      %22 = tpu.matmul %20, %21, %cst_20 {dimension_numbers = #tpu.dot_dimension_numbers<[1], [0], [0], [1], [0, 0, 1, 1], [], []>} : vector<2x2xf32>, vector<2x4xf32>, vector<2x4xf32> -> vector<2x4xf32>
      %c0_21 = arith.constant 0 : index
      %c0_22 = arith.constant 0 : index
      %23 = vector.load %arg5[%c0_21, %c0_22] : memref<1x4xf32, #tpu.memory_space<vmem>>, vector<1x4xf32>
      %24 = vector.broadcast %23 : vector<1x4xf32> to vector<2x4xf32>
      %25 = arith.addf %22, %24 : vector<2x4xf32>
      %26 = arith.negf %25 : vector<2x4xf32>
      %27 = math.exp %26 : vector<2x4xf32>
      %cst_23 = arith.constant 1.000000e+00 : f32
      %28 = vector.broadcast %cst_23 : f32 to vector<2x4xf32>
      %29 = arith.addf %28, %27 : vector<2x4xf32>
      %30 = arith.divf %28, %29 : vector<2x4xf32>
      %c0_24 = arith.constant 0 : index
      %c0_25 = arith.constant 0 : index
      %31 = vector.load %arg6[%c0_24, %c0_25] : memref<2x4xf32, #tpu.memory_space<vmem>>, vector<2x4xf32>
      tpu.vector_store %arg6[%c0_24, %c0_25], %30 {strides = array<i32>} : memref<2x4xf32, #tpu.memory_space<vmem>>, vector<2x4xf32>,
    } else {
    }
    return
  }
  func.func @transform_0(%arg0: i32) -> (i32, i32, i32) {
    %c0_i32 = arith.constant 0 : i32
    %c0_i32_0 = arith.constant 0 : i32
    %c0_i32_1 = arith.constant 0 : i32
    return %c0_i32, %arg0, %c0_i32_0 : i32, i32, i32
  }
  func.func @transform_1(%arg0: i32) -> (i32, i32) {
    %c0_i32 = arith.constant 0 : i32
    %c0_i32_0 = arith.constant 0 : i32
    %c0_i32_1 = arith.constant 0 : i32
    return %c0_i32, %c0_i32_0 : i32, i32
  }
  func.func @transform_2(%arg0: i32) -> (i32, i32) {
    %c0_i32 = arith.constant 0 : i32
    %c0_i32_0 = arith.constant 0 : i32
    %c0_i32_1 = arith.constant 0 : i32
    return %c0_i32, %c0_i32_0 : i32, i32
  }
  func.func @transform_3(%arg0: i32) -> (i32, i32) {
    %c0_i32 = arith.constant 0 : i32
    %c0_i32_0 = arith.constant 0 : i32
    %c0_i32_1 = arith.constant 0 : i32
    return %c0_i32, %c0_i32_0 : i32, i32
  }
  func.func @transform_4(%arg0: i32) -> (i32, i32) {
    %c0_i32 = arith.constant 0 : i32
    %c0_i32_0 = arith.constant 0 : i32
    %c0_i32_1 = arith.constant 0 : i32
    return %c0_i32, %c0_i32_0 : i32, i32
  }
  func.func @transform_5(%arg0: i32) -> (i32, i32) {
    %c0_i32 = arith.constant 0 : i32
    %c0_i32_0 = arith.constant 0 : i32
    %c0_i32_1 = arith.constant 0 : i32
    return %c0_i32, %c0_i32_0 : i32, i32
  }
}

</mosaic_0001>

<llo_original>
// kernel: tpu_custom_call.1
$region0: #{tpu_custom_call.1}
  #allocation0 [shape = 'u32[]', space=smem, size = 0x4, offset = 0x4, fixed_abs, tag = 'smem constant byte address 0x4 - core index']
  #allocation1 [shape = 'u32[144,128]{1,0:T(1,128)}', space=vmem, size = 0x12000, scoped, tag = 'internal scratch']
  #allocation2 [shape = 'f32[2,4]{1,0:T(2,128)}', space=vmem, size = 0x400, scoped, tag = 'scratch operand']
  %s0 = inlined_call_operand.vmem [shape: f32[2,256,4], index: 0, kind: input, shape index: {}]
  %s1 = inlined_call_operand.vmem [shape: f32[4,2], index: 1, kind: input, shape index: {}]
  %s2 = inlined_call_operand.vmem [shape: f32[1,2], index: 2, kind: input, shape index: {}]
  %s3 = inlined_call_operand.vmem [shape: f32[2,4], index: 3, kind: input, shape index: {}]
  %s4 = inlined_call_operand.vmem [shape: f32[1,4], index: 4, kind: input, shape index: {}]
  %s5 = inlined_call_operand.hbm [shape: f32[2,4], index: 5, kind: output, shape index: {}]
  %s6 = sld [smem:[#allocation0]]
  $region38: #{tpu_custom_call.1} parent=0
    _
  %s8 = ssub.s32 1, %s6
  %s9 = scalar_select 0, %s8, %s6
  $region1: #{tpu_custom_call.1} parent=0
    #allocation3 [shape = 'u8[1024]{0}', space=vmem, size = 0x400, scoped, tag = 'output window, operand 0, single buffered']
    #allocation4 [shape = 's32[1]{0}', space=sflag, size = 0x4, scoped, tag = 'scoped memory for tpu_custom_call.1']
    %10 = vsyncpa [#allocation4], 0
    // Predicated region
    $region2: #{tpu_custom_call.1} parent=1 // pred_check
      _
    $region3: #{tpu_custom_call.1} parent=1 // pred_check_branch
      %12 = sbr.rel (0) target = $region5
    $region4: #{tpu_custom_call.1} parent=1 // pred_region
      _
    $region5: #{tpu_custom_call.1} parent=1 // pred_fallthru
      _
    // Predicated region
    $region6: #{tpu_custom_call.1} parent=1 // pred_check
      _
    $region7: #{tpu_custom_call.1} parent=1 // pred_check_branch
      %14 = sbr.rel (0) target = $region9
    $region8: #{tpu_custom_call.1} parent=1 // pred_region
      _
    $region9: #{tpu_custom_call.1} parent=1 // pred_fallthru
      _
    // Predicated region
    $region10: #{tpu_custom_call.1} parent=1 // pred_check
      _
    $region11: #{tpu_custom_call.1} parent=1 // pred_check_branch
      %16 = sbr.rel (0) target = $region13
    $region12: #{tpu_custom_call.1} parent=1 // pred_region
      _
    $region13: #{tpu_custom_call.1} parent=1 // pred_fallthru
      _
    // Predicated region
    $region14: #{tpu_custom_call.1} parent=1 // pred_check
      _
    $region15: #{tpu_custom_call.1} parent=1 // pred_check_branch
      %18 = sbr.rel (0) target = $region17
    $region16: #{tpu_custom_call.1} parent=1 // pred_region
      _
    $region17: #{tpu_custom_call.1} parent=1 // pred_fallthru
      _
    // Predicated region
    $region18: #{tpu_custom_call.1} parent=1 // pred_check
      _
    $region19: #{tpu_custom_call.1} parent=1 // pred_check_branch
      %20 = sbr.rel (0) target = $region21
    $region20: #{tpu_custom_call.1} parent=1 // pred_region
      _
    $region21: #{tpu_custom_call.1} parent=1 // pred_fallthru
      _
    %p21 = scmp.eq.s32.totalorder 0, 0
    // Predicated region
    $region22: #{tpu_custom_call.1} parent=1 // pred_check
      %p22 = pneg %p21
    $region23: #{tpu_custom_call.1} parent=1 // pred_check_branch
      %24 = sbr.rel (%p22) target = $region25
    $region24: #{tpu_custom_call.1} parent=1 // pred_region
      %vm25 = vcmask 25600
      %26 = vst.msk [vmem:[#allocation2] sm:$0x3] %vm25, 0.0
    $region25: #{tpu_custom_call.1} parent=1 // pred_fallthru
      _
    %v27 = vld [vmem:[#allocation2] sm:$0x3]
    %v28 = vld [vmem:[%s0] sm:$0xff]
    %v29 = vld [vmem:[%s0 + $0x8] sm:$0xff]
    %v30 = vld [vmem:[%s0 + $0x10] sm:$0xff]
    %v31 = vld [vmem:[%s0 + $0x18] sm:$0xff]
    %v32 = vld [vmem:[%s0 + $0x20] sm:$0xff]
    %v33 = vld [vmem:[%s0 + $0x28] sm:$0xff]
    %v34 = vld [vmem:[%s0 + $0x30] sm:$0xff]
    %v35 = vld [vmem:[%s0 + $0x38] sm:$0xff]
    %v36 = vld [vmem:[%s0 + $0x40] sm:$0xff]
    %v37 = vld [vmem:[%s0 + $0x48] sm:$0xff]
    %v38 = vld [vmem:[%s0 + $0x50] sm:$0xff]
    %v39 = vld [vmem:[%s0 + $0x58] sm:$0xff]
    %v40 = vld [vmem:[%s0 + $0x60] sm:$0xff]
    %v41 = vld [vmem:[%s0 + $0x68] sm:$0xff]
    %v42 = vld [vmem:[%s0 + $0x70] sm:$0xff]
    %v43 = vld [vmem:[%s0 + $0x78] sm:$0xff]
    %v44 = vld [vmem:[%s0 + $0x80] sm:$0xff]
    %v45 = vld [vmem:[%s0 + $0x88] sm:$0xff]
    %v46 = vld [vmem:[%s0 + $0x90] sm:$0xff]
    %v47 = vld [vmem:[%s0 + $0x98] sm:$0xff]
    %v48 = vld [vmem:[%s0 + $0xa0] sm:$0xff]
    %v49 = vld [vmem:[%s0 + $0xa8] sm:$0xff]
    %v50 = vld [vmem:[%s0 + $0xb0] sm:$0xff]
    %v51 = vld [vmem:[%s0 + $0xb8] sm:$0xff]
    %v52 = vld [vmem:[%s0 + $0xc0] sm:$0xff]
    %v53 = vld [vmem:[%s0 + $0xc8] sm:$0xff]
    %v54 = vld [vmem:[%s0 + $0xd0] sm:$0xff]
    %v55 = vld [vmem:[%s0 + $0xd8] sm:$0xff]
    %v56 = vld [vmem:[%s0 + $0xe0] sm:$0xff]
    %v57 = vld [vmem:[%s0 + $0xe8] sm:$0xff]
    %v58 = vld [vmem:[%s0 + $0xf0] sm:$0xff]
    %v59 = vld [vmem:[%s0 + $0xf8] sm:$0xff]
    %v60 = vld [vmem:[%s0 + $0x100] sm:$0xff]
    %v61 = vld [vmem:[%s0 + $0x108] sm:$0xff]
    %v62 = vld [vmem:[%s0 + $0x110] sm:$0xff]
    %v63 = vld [vmem:[%s0 + $0x118] sm:$0xff]
    %v64 = vld [vmem:[%s0 + $0x120] sm:$0xff]
    %v65 = vld [vmem:[%s0 + $0x128] sm:$0xff]
    %v66 = vld [vmem:[%s0 + $0x130] sm:$0xff]
    %v67 = vld [vmem:[%s0 + $0x138] sm:$0xff]
    %v68 = vld [vmem:[%s0 + $0x140] sm:$0xff]
    %v69 = vld [vmem:[%s0 + $0x148] sm:$0xff]
    %v70 = vld [vmem:[%s0 + $0x150] sm:$0xff]
    %v71 = vld [vmem:[%s0 + $0x158] sm:$0xff]
    %v72 = vld [vmem:[%s0 + $0x160] sm:$0xff]
    %v73 = vld [vmem:[%s0 + $0x168] sm:$0xff]
    %v74 = vld [vmem:[%s0 + $0x170] sm:$0xff]
    %v75 = vld [vmem:[%s0 + $0x178] sm:$0xff]
    %v76 = vld [vmem:[%s0 + $0x180] sm:$0xff]
    %v77 = vld [vmem:[%s0 + $0x188] sm:$0xff]
    %v78 = vld [vmem:[%s0 + $0x190] sm:$0xff]
    %v79 = vld [vmem:[%s0 + $0x198] sm:$0xff]
    %v80 = vld [vmem:[%s0 + $0x1a0] sm:$0xff]
    %v81 = vld [vmem:[%s0 + $0x1a8] sm:$0xff]
    %v82 = vld [vmem:[%s0 + $0x1b0] sm:$0xff]
    %v83 = vld [vmem:[%s0 + $0x1b8] sm:$0xff]
    %v84 = vld [vmem:[%s0 + $0x1c0] sm:$0xff]
    %v85 = vld [vmem:[%s0 + $0x1c8] sm:$0xff]
    %v86 = vld [vmem:[%s0 + $0x1d0] sm:$0xff]
    %v87 = vld [vmem:[%s0 + $0x1d8] sm:$0xff]
    %v88 = vld [vmem:[%s0 + $0x1e0] sm:$0xff]
    %v89 = vld [vmem:[%s0 + $0x1e8] sm:$0xff]
    %v90 = vld [vmem:[%s0 + $0x1f0] sm:$0xff]
    %v91 = vld [vmem:[%s0 + $0x1f8] sm:$0xff]
    %vm92 = vcmask 31744
    %v93 = vsel %vm92, %v28, 0.0
    %v94 = vsel %vm92, %v29, 0.0
    %v95 = vadd.f32 %v93, %v94
    %v96 = vsel %vm92, %v30, 0.0
    %v97 = vadd.f32 %v95, %v96
    %v98 = vsel %vm92, %v31, 0.0
    %v99 = vadd.f32 %v97, %v98
    %v100 = vsel %vm92, %v32, 0.0
    %v101 = vadd.f32 %v99, %v100
    %v102 = vsel %vm92, %v33, 0.0
    %v103 = vadd.f32 %v101, %v102
    %v104 = vsel %vm92, %v34, 0.0
    %v105 = vadd.f32 %v103, %v104
    %v106 = vsel %vm92, %v35, 0.0
    %v107 = vadd.f32 %v105, %v106
    %v108 = vsel %vm92, %v36, 0.0
    %v109 = vadd.f32 %v107, %v108
    %v110 = vsel %vm92, %v37, 0.0
    %v111 = vadd.f32 %v109, %v110
    %v112 = vsel %vm92, %v38, 0.0
    %v113 = vadd.f32 %v111, %v112
    %v114 = vsel %vm92, %v39, 0.0
    %v115 = vadd.f32 %v113, %v114
    %v116 = vsel %vm92, %v40, 0.0
    %v117 = vadd.f32 %v115, %v116
    %v118 = vsel %vm92, %v41, 0.0
    %v119 = vadd.f32 %v117, %v118
    %v120 = vsel %vm92, %v42, 0.0
    %v121 = vadd.f32 %v119, %v120
    %v122 = vsel %vm92, %v43, 0.0
    %v123 = vadd.f32 %v121, %v122
    %v124 = vsel %vm92, %v44, 0.0
    %v125 = vadd.f32 %v123, %v124
    %v126 = vsel %vm92, %v45, 0.0
    %v127 = vadd.f32 %v125, %v126
    %v128 = vsel %vm92, %v46, 0.0
    %v129 = vadd.f32 %v127, %v128
    %v130 = vsel %vm92, %v47, 0.0
    %v131 = vadd.f32 %v129, %v130
    %v132 = vsel %vm92, %v48, 0.0
    %v133 = vadd.f32 %v131, %v132
    %v134 = vsel %vm92, %v49, 0.0
    %v135 = vadd.f32 %v133, %v134
    %v136 = vsel %vm92, %v50, 0.0
    %v137 = vadd.f32 %v135, %v136
    %v138 = vsel %vm92, %v51, 0.0
    %v139 = vadd.f32 %v137, %v138
    %v140 = vsel %vm92, %v52, 0.0
    %v141 = vadd.f32 %v139, %v140
    %v142 = vsel %vm92, %v53, 0.0
    %v143 = vadd.f32 %v141, %v142
    %v144 = vsel %vm92, %v54, 0.0
    %v145 = vadd.f32 %v143, %v144
    %v146 = vsel %vm92, %v55, 0.0
    %v147 = vadd.f32 %v145, %v146
    %v148 = vsel %vm92, %v56, 0.0
    %v149 = vadd.f32 %v147, %v148
    %v150 = vsel %vm92, %v57, 0.0
    %v151 = vadd.f32 %v149, %v150
    %v152 = vsel %vm92, %v58, 0.0
    %v153 = vadd.f32 %v151, %v152
    %v154 = vsel %vm92, %v59, 0.0
    %v155 = vadd.f32 %v153, %v154
    %v156 = vrot.slane %v155, 4
    %v157 = vadd.f32 %v155, %v156
    %v158 = vrot.slane %v157, 2
    %v159 = vadd.f32 %v157, %v158
    %v160 = vrot.slane %v159, 1
    %v161 = vadd.f32 %v159, %v160
    %v162 = vsel %vm92, %v60, 0.0
    %v163 = vsel %vm92, %v61, 0.0
    %v164 = vadd.f32 %v162, %v163
    %v165 = vsel %vm92, %v62, 0.0
    %v166 = vadd.f32 %v164, %v165
    %v167 = vsel %vm92, %v63, 0.0
    %v168 = vadd.f32 %v166, %v167
    %v169 = vsel %vm92, %v64, 0.0
    %v170 = vadd.f32 %v168, %v169
    %v171 = vsel %vm92, %v65, 0.0
    %v172 = vadd.f32 %v170, %v171
    %v173 = vsel %vm92, %v66, 0.0
    %v174 = vadd.f32 %v172, %v173
    %v175 = vsel %vm92, %v67, 0.0
    %v176 = vadd.f32 %v174, %v175
    %v177 = vsel %vm92, %v68, 0.0
    %v178 = vadd.f32 %v176, %v177
    %v179 = vsel %vm92, %v69, 0.0
    %v180 = vadd.f32 %v178, %v179
    %v181 = vsel %vm92, %v70, 0.0
    %v182 = vadd.f32 %v180, %v181
    %v183 = vsel %vm92, %v71, 0.0
    %v184 = vadd.f32 %v182, %v183
    %v185 = vsel %vm92, %v72, 0.0
    %v186 = vadd.f32 %v184, %v185
    %v187 = vsel %vm92, %v73, 0.0
    %v188 = vadd.f32 %v186, %v187
    %v189 = vsel %vm92, %v74, 0.0
    %v190 = vadd.f32 %v188, %v189
    %v191 = vsel %vm92, %v75, 0.0
    %v192 = vadd.f32 %v190, %v191
    %v193 = vsel %vm92, %v76, 0.0
    %v194 = vadd.f32 %v192, %v193
    %v195 = vsel %vm92, %v77, 0.0
    %v196 = vadd.f32 %v194, %v195
    %v197 = vsel %vm92, %v78, 0.0
    %v198 = vadd.f32 %v196, %v197
    %v199 = vsel %vm92, %v79, 0.0
    %v200 = vadd.f32 %v198, %v199
    %v201 = vsel %vm92, %v80, 0.0
    %v202 = vadd.f32 %v200, %v201
    %v203 = vsel %vm92, %v81, 0.0
    %v204 = vadd.f32 %v202, %v203
    %v205 = vsel %vm92, %v82, 0.0
    %v206 = vadd.f32 %v204, %v205
    %v207 = vsel %vm92, %v83, 0.0
    %v208 = vadd.f32 %v206, %v207
    %v209 = vsel %vm92, %v84, 0.0
    %v210 = vadd.f32 %v208, %v209
    %v211 = vsel %vm92, %v85, 0.0
    %v212 = vadd.f32 %v210, %v211
    %v213 = vsel %vm92, %v86, 0.0
    %v214 = vadd.f32 %v212, %v213
    %v215 = vsel %vm92, %v87, 0.0
    %v216 = vadd.f32 %v214, %v215
    %v217 = vsel %vm92, %v88, 0.0
    %v218 = vadd.f32 %v216, %v217
    %v219 = vsel %vm92, %v89, 0.0
    %v220 = vadd.f32 %v218, %v219
    %v221 = vsel %vm92, %v90, 0.0
    %v222 = vadd.f32 %v220, %v221
    %v223 = vsel %vm92, %v91, 0.0
    %v224 = vadd.f32 %v222, %v223
    %v225 = vrot.slane %v224, 4
    %v226 = vadd.f32 %v224, %v225
    %v227 = vrot.slane %v226, 2
    %v228 = vadd.f32 %v226, %v227
    %v229 = vrot.slane %v228, 1
    %v230 = vadd.f32 %v228, %v229
    %vm233 = vcmask 1041409
    %v234 = vsel %vm233, %v230, %v161
    %v236 = vadd.f32 %v27, %v234
    %vm237 = vcmask 25600
    %238 = vst.msk [vmem:[#allocation2] sm:$0x3] %vm237, %v236
    // Predicated region
    $region26: #{tpu_custom_call.1} parent=1 // pred_check
      %p239 = pneg %p21
    $region27: #{tpu_custom_call.1} parent=1 // pred_check_branch
      %241 = sbr.rel (%p239) target = $region29
    $region28: #{tpu_custom_call.1} parent=1 // pred_region
      %v242 = vld [vmem:[#allocation2] sm:$0x3]
      %v243 = vmul.f32 %v242, 0.00390625
      %v244 = vld [vmem:[%s1] sm:$0xf]
      %v245 = vld [vmem:[%s2] sm:$0x1]
      %v247 = vlaneseq
      %v248 = vshrl.u32 %v247, 7
      %v249 = vsub.s32 0, %v248
      %v250 = vrot.slane %v245, %v249
      %v253 = vsel %vm92, %v243, 0
      %vm255 = vcmask 1043456
      %v257 = vsel %vm255, %v244, 0
      %259 = vmatprep.subr.mxu0 0.0
      %260 = vmatpush1.msra.mxu0 %v257
      %261 = vmatprep.subr.mxu0 0.0
      %262 = vmatpush1.msra.mxu0 0.0
      %263 = vmatprep.subr.mxu0 0.0
      %264 = vmatpush1.msra.mxu0 0.0
      %265 = vmatprep.subr.mxu0 0.0
      %266 = vmatpush1.msra.mxu0 0.0
      %267 = vmatprep.subr.mxu0 0.0
      %268 = vmatpush1.msra.mxu0 0.0
      %269 = vmatprep.subr.mxu0 0.0
      %270 = vmatpush1.msra.mxu0 0.0
      %271 = vmatprep.subr.mxu0 0.0
      %272 = vmatpush1.msra.mxu0 0.0
      %273 = vmatprep.subr.mxu0 0.0
      %274 = vmatpush1.msra.mxu0 0.0
      %275 = vmatprep.subr.mxu0 0.0
      %276 = vmatpush1.msra.mxu0 0.0
      %277 = vmatprep.subr.mxu0 0.0
      %278 = vmatpush1.msra.mxu0 0.0
      %279 = vmatprep.subr.mxu0 0.0
      %280 = vmatpush1.msra.mxu0 0.0
      %281 = vmatprep.subr.mxu0 0.0
      %282 = vmatpush1.msra.mxu0 0.0
      %283 = vmatprep.subr.mxu0 0.0
      %284 = vmatpush1.msra.mxu0 0.0
      %285 = vmatprep.subr.mxu0 0.0
      %286 = vmatpush1.msra.mxu0 0.0
      %287 = vmatprep.subr.mxu0 0.0
      %288 = vmatpush1.msra.mxu0 0.0
      %289 = vmatprep.subr.mxu0 0.0
      %290 = vmatpush1.msra.mxu0 0.0
      %291 = vmatprep.subr.mxu0 0.0
      %292 = vmatpush1.msra.mxu0 0.0
      %293 = vmatprep.subr.mxu0 0.0
      %294 = vmatpush1.msra.mxu0 0.0
      %295 = vmatprep.subr.mxu0 0.0
      %296 = vmatpush1.msra.mxu0 0.0
      %297 = vmatprep.subr.mxu0 0.0
      %298 = vmatpush1.msra.mxu0 0.0
      %299 = vmatprep.subr.mxu0 0.0
      %300 = vmatpush1.msra.mxu0 0.0
      %301 = vmatprep.subr.mxu0 0.0
      %302 = vmatpush1.msra.mxu0 0.0
      %303 = vmatprep.subr.mxu0 0.0
      %304 = vmatpush1.msra.mxu0 0.0
      %305 = vmatprep.subr.mxu0 0.0
      %306 = vmatpush1.msra.mxu0 0.0
      %307 = vmatprep.subr.mxu0 0.0
      %308 = vmatpush1.msra.mxu0 0.0
      %309 = vmatprep.subr.mxu0 0.0
      %310 = vmatpush1.msra.mxu0 0.0
      %311 = vmatprep.subr.mxu0 0.0
      %312 = vmatpush1.msra.mxu0 0.0
      %313 = vmatprep.subr.mxu0 0.0
      %314 = vmatpush1.msra.mxu0 0.0
      %315 = vmatprep.subr.mxu0 0.0
      %316 = vmatpush1.msra.mxu0 0.0
      %317 = vmatprep.subr.mxu0 0.0
      %318 = vmatpush1.msra.mxu0 0.0
      %319 = vmatprep.subr.mxu0 0.0
      %320 = vmatpush1.msra.mxu0 0.0
      %321 = vmatprep.subr.mxu0 0.0
      %322 = vmatpush1.msra.mxu0 0.0
      %323 = vmatprep.mubr.f32.mxu0 0.0
      %324 = vmatmul.mubr.f32.gmra.mrb[0].mxu0 %v253
      %v325 = vpop.f32.mrb[0].mxu0
      %v326 = vadd.f32 %v250, %v325
      %v327 = vpop.f32.mrb[0].mxu0
      %328 = vdwg.mxu0
      %v329 = vmax.f32 %v326, 0.0
      %v330 = vld [vmem:[%s3] sm:$0x3]
      %v331 = vld [vmem:[%s4] sm:$0x1]
      %v333 = vlaneseq
      %v334 = vshrl.u32 %v333, 7
      %v335 = vsub.s32 0, %v334
      %v336 = vrot.slane %v331, %v335
      %vm338 = vcmask 15360
      %v340 = vsel %vm338, %v329, 0
      %vm342 = vcmask 1041408
      %v344 = vsel %vm342, %v330, 0
      %346 = vmatprep.subr.mxu0 0.0
      %347 = vmatpush1.msra.mxu0 %v344
      %348 = vmatprep.subr.mxu0 0.0
      %349 = vmatpush1.msra.mxu0 0.0
      %350 = vmatprep.subr.mxu0 0.0
      %351 = vmatpush1.msra.mxu0 0.0
      %352 = vmatprep.subr.mxu0 0.0
      %353 = vmatpush1.msra.mxu0 0.0
      %354 = vmatprep.subr.mxu0 0.0
      %355 = vmatpush1.msra.mxu0 0.0
      %356 = vmatprep.subr.mxu0 0.0
      %357 = vmatpush1.msra.mxu0 0.0
      %358 = vmatprep.subr.mxu0 0.0
      %359 = vmatpush1.msra.mxu0 0.0
      %360 = vmatprep.subr.mxu0 0.0
      %361 = vmatpush1.msra.mxu0 0.0
      %362 = vmatprep.subr.mxu0 0.0
      %363 = vmatpush1.msra.mxu0 0.0
      %364 = vmatprep.subr.mxu0 0.0
      %365 = vmatpush1.msra.mxu0 0.0
      %366 = vmatprep.subr.mxu0 0.0
      %367 = vmatpush1.msra.mxu0 0.0
      %368 = vmatprep.subr.mxu0 0.0
      %369 = vmatpush1.msra.mxu0 0.0
      %370 = vmatprep.subr.mxu0 0.0
      %371 = vmatpush1.msra.mxu0 0.0
      %372 = vmatprep.subr.mxu0 0.0
      %373 = vmatpush1.msra.mxu0 0.0
      %374 = vmatprep.subr.mxu0 0.0
      %375 = vmatpush1.msra.mxu0 0.0
      %376 = vmatprep.subr.mxu0 0.0
      %377 = vmatpush1.msra.mxu0 0.0
      %378 = vmatprep.subr.mxu0 0.0
      %379 = vmatpush1.msra.mxu0 0.0
      %380 = vmatprep.subr.mxu0 0.0
      %381 = vmatpush1.msra.mxu0 0.0
      %382 = vmatprep.subr.mxu0 0.0
      %383 = vmatpush1.msra.mxu0 0.0
      %384 = vmatprep.subr.mxu0 0.0
      %385 = vmatpush1.msra.mxu0 0.0
      %386 = vmatprep.subr.mxu0 0.0
      %387 = vmatpush1.msra.mxu0 0.0
      %388 = vmatprep.subr.mxu0 0.0
      %389 = vmatpush1.msra.mxu0 0.0
      %390 = vmatprep.subr.mxu0 0.0
      %391 = vmatpush1.msra.mxu0 0.0
      %392 = vmatprep.subr.mxu0 0.0
      %393 = vmatpush1.msra.mxu0 0.0
      %394 = vmatprep.subr.mxu0 0.0
      %395 = vmatpush1.msra.mxu0 0.0
      %396 = vmatprep.subr.mxu0 0.0
      %397 = vmatpush1.msra.mxu0 0.0
      %398 = vmatprep.subr.mxu0 0.0
      %399 = vmatpush1.msra.mxu0 0.0
      %400 = vmatprep.subr.mxu0 0.0
      %401 = vmatpush1.msra.mxu0 0.0
      %402 = vmatprep.subr.mxu0 0.0
      %403 = vmatpush1.msra.mxu0 0.0
      %404 = vmatprep.subr.mxu0 0.0
      %405 = vmatpush1.msra.mxu0 0.0
      %406 = vmatprep.subr.mxu0 0.0
      %407 = vmatpush1.msra.mxu0 0.0
      %408 = vmatprep.subr.mxu0 0.0
      %409 = vmatpush1.msra.mxu0 0.0
      %410 = vmatprep.mubr.f32.mxu0 0.0
      %411 = vmatmul.mubr.f32.gmra.mrb[0].mxu0 %v340
      %v412 = vpop.f32.mrb[0].mxu0
      %v413 = vadd.f32 %v336, %v412
      %v414 = vpop.f32.mrb[0].mxu0
      %415 = vdwg.mxu0
      %v416 = vxor.u32 %v413, 2147483648
      %v417 = vmul.f32 %v416, 1.442695
      %v418 = vpow.pop %v417
      %v419 = vadd.f32 %v418, 1.0
      %v420 = vrcp.pop %v419
      %v421 = vmul.f32 1.0, %v420
      %422 = vst.msk [vmem:[#allocation3] sm:$0x3] %vm237, %v421
    $region29: #{tpu_custom_call.1} parent=1 // pred_fallthru
      _
    // Predicated region
    $region30: #{tpu_custom_call.1} parent=1 // pred_check
      _
    $region31: #{tpu_custom_call.1} parent=1 // pred_check_branch
      %424 = sbr.rel (0) target = $region33
    $region32: #{tpu_custom_call.1} parent=1 // pred_region
      %s426 = ssub.s32 32, 32
      %427 = vsyncadd [#allocation4], %s426
      %s429 = sshll.u32 [#allocation3], 4
      %s430 = int_to_ptr.vmem [resolvable:$true] %s429
      %432 = dma.vmem_to_hbm [thread:$0]  %s430, 32, %s5, [#allocation4]
    $region33: #{tpu_custom_call.1} parent=1 // pred_fallthru
      _
    // Predicated region
    $region34: #{tpu_custom_call.1} parent=1 // pred_check
      _
    $region35: #{tpu_custom_call.1} parent=1 // pred_check_branch
      %434 = sbr.rel (0) target = $region37
    $region36: #{tpu_custom_call.1} parent=1 // pred_region
      %435 = dma.done [#allocation4], 32
    $region37: #{tpu_custom_call.1} parent=1 // pred_fallthru
      _
    %436 = vsyncpa [#allocation4], 1

</llo_original>
